<compile_context>
chip_gen: v7x
topology: tpu7x:2x2x1
jax: 0.10.0
libtpu: 0.0.40
codegen_flags: <defaults>
</compile_context>

<pallas_src>
import functools
import math

import jax
import jax.numpy as jnp
from jax import lax
from jax.experimental import pallas as pl
from jax.experimental.pallas import tpu as pltpu

LN_EPS = 1e-5     # GPT-2 layer_norm_epsilon
W_STD = 0.02      # GPT-2 initializer_range


def _tpu_kind():
    try:
        return jax.devices()[0].device_kind.lower()
    except Exception:
        return ""


_KIND = _tpu_kind()
if "v7" in _KIND:
    # 64 MiB physical VMEM per TC -> moderate tiles, explicit headroom.
    _M_CAP, _N_CAP, _K_CAP = 512, 2048, 512
    _VMEM_LIMIT = 48 * 1024 * 1024
elif "v6" in _KIND:
    _M_CAP, _N_CAP, _K_CAP = 1024, 2048, 512
    _VMEM_LIMIT = 100 * 1024 * 1024
elif "v5e" in _KIND or "v5 lite" in _KIND or "v5lite" in _KIND:
    _M_CAP, _N_CAP, _K_CAP = 512, 1024, 512
    _VMEM_LIMIT = 96 * 1024 * 1024
else:
    _M_CAP, _N_CAP, _K_CAP = 512, 1024, 512
    _VMEM_LIMIT = 64 * 1024 * 1024

_LN_ROW_CAP = 1024
_ATTN_Q_CAP = 512
_ATTN_KV_CAP = 512


def _pick_tile(dim, cap, mult):
    """Largest tile <= cap that divides dim and is a multiple of `mult`.
    Falls back to the full dim (full-extent blocks are always legal).
    TODO(synk): for pathological dims (e.g. GPT-2 XL C=1600 which has no
    128-multiple divisor) pad the weight dims at init instead of relying on
    this full-dim fallback."""
    if dim <= cap:
        return dim
    for d in range(cap, 0, -1):
        if dim % d == 0 and d % mult == 0:
            return d
    return dim


def _gelu_new(x):
    # GPT-2 "gelu_new" (tanh approximation), f32.
    c = math.sqrt(2.0 / math.pi)
    return 0.5 * x * (1.0 + jnp.tanh(c * (x + 0.044715 * x * x * x)))


# ---------------------------------------------------------------------------
# LayerNorm (row-tiled)
# ---------------------------------------------------------------------------
def _ln_kernel(x_ref, g_ref, b_ref, o_ref):
    x = x_ref[...].astype(jnp.float32)
    mu = jnp.mean(x, axis=-1, keepdims=True)
    var = jnp.mean(jnp.square(x - mu), axis=-1, keepdims=True)
    y = (x - mu) * lax.rsqrt(var + LN_EPS) * g_ref[...] + b_ref[...]
    o_ref[...] = y.astype(o_ref.dtype)


def layernorm(x, g, b, out_dtype=jnp.bfloat16):
    M, C = x.shape
    mt = _pick_tile(M, _LN_ROW_CAP, 16)
    return pl.pallas_call(
        _ln_kernel,
        out_shape=jax.ShapeDtypeStruct((M, C), out_dtype),
        grid=(M // mt,),
        in_specs=[pl.BlockSpec((mt, C), lambda i: (i, 0)),
                  pl.BlockSpec((1, C), lambda i: (0, 0)),
                  pl.BlockSpec((1, C), lambda i: (0, 0))],
        out_specs=pl.BlockSpec((mt, C), lambda i: (i, 0)),
        compiler_params=pltpu.CompilerParams(
            dimension_semantics=("parallel",),
            vmem_limit_bytes=_VMEM_LIMIT),
    )(x, g, b)


# ---------------------------------------------------------------------------
# Tiled matmul with fused bias / activation / residual epilogue
# ---------------------------------------------------------------------------
def _matmul_kernel(activation, has_res, *refs):
    if has_res:
        x_ref, w_ref, b_ref, res_ref, o_ref, acc_ref = refs
    else:
        x_ref, w_ref, b_ref, o_ref, acc_ref = refs
        res_ref = None

    k = pl.program_id(2)

    @pl.when(k == 0)
    def _():
        acc_ref[...] = jnp.zeros_like(acc_ref)

    acc_ref[...] += jnp.dot(x_ref[...], w_ref[...],
                            preferred_element_type=jnp.float32)

    @pl.when(k == pl.num_programs(2) - 1)
    def _():
        y = acc_ref[...] + b_ref[...].astype(jnp.float32)
        if activation == "gelu":
            y = _gelu_new(y)
        if res_ref is not None:
            y = y + res_ref[...].astype(jnp.float32)
        o_ref[...] = y.astype(o_ref.dtype)


def fused_matmul(x, w, b=None, *, activation=None, residual=None,
                 out_dtype=jnp.bfloat16,
                 m_cap=None, n_cap=None, k_cap=None):
    M, K = x.shape
    _, N = w.shape
    mt = _pick_tile(M, _M_CAP if m_cap is None else m_cap, 8)
    nt = _pick_tile(N, _N_CAP if n_cap is None else n_cap, 128)
    kt = _pick_tile(K, _K_CAP if k_cap is None else k_cap, 128)
    if b is None:
        b = jnp.zeros((1, N), jnp.float32)

    in_specs = [pl.BlockSpec((mt, kt), lambda i, j, k: (i, k)),
                pl.BlockSpec((kt, nt), lambda i, j, k: (k, j)),
                pl.BlockSpec((1, nt), lambda i, j, k: (0, j))]
    args = [x.astype(jnp.bfloat16), w.astype(jnp.bfloat16), b]
    if residual is not None:
        # residual block index is constant across k -> fetched once per (i, j)
        in_specs.append(pl.BlockSpec((mt, nt), lambda i, j, k: (i, j)))
        args.append(residual.astype(jnp.bfloat16))

    return pl.pallas_call(
        functools.partial(_matmul_kernel, activation, residual is not None),
        out_shape=jax.ShapeDtypeStruct((M, N), out_dtype),
        grid=(M // mt, N // nt, K // kt),
        in_specs=in_specs,
        out_specs=pl.BlockSpec((mt, nt), lambda i, j, k: (i, j)),
        scratch_shapes=[pltpu.VMEM((mt, nt), jnp.float32)],
        compiler_params=pltpu.CompilerParams(
            dimension_semantics=("parallel", "parallel", "arbitrary"),
            vmem_limit_bytes=_VMEM_LIMIT),
    )(*args)


# ---------------------------------------------------------------------------
# Flash-style causal attention over (B*H, T, hd)
# ---------------------------------------------------------------------------
def _flash_attn_kernel(scale, q_tile, kv_tile,
                       q_ref, k_ref, v_ref, o_ref, m_sc, l_sc, acc_sc):
    qi = pl.program_id(1)
    ki = pl.program_id(2)

    @pl.when(ki == 0)
    def _():
        m_sc[...] = jnp.full_like(m_sc, -jnp.inf)
        l_sc[...] = jnp.zeros_like(l_sc)
        acc_sc[...] = jnp.zeros_like(acc_sc)

    # Skip kv tiles that are entirely in the causal future of this q tile
    # (their K/V DMAs are also elided via the clamped index maps below).
    @pl.when(ki * kv_tile <= qi * q_tile + (q_tile - 1))
    def _():
        q = q_ref[0] * scale              # fold 1/sqrt(hd) into the small q tile
        k = k_ref[0]
        v = v_ref[0]
        s = lax.dot_general(q, k, (((1,), (1,)), ((), ())),
                            preferred_element_type=jnp.float32)
        row = qi * q_tile + lax.broadcasted_iota(jnp.int32, s.shape, 0)
        col = ki * kv_tile + lax.broadcasted_iota(jnp.int32, s.shape, 1)
        s = jnp.where(row >= col, s, -1e30)
        m_new = jnp.maximum(m_sc[...], jnp.max(s, axis=-1, keepdims=True))
        alpha = jnp.exp(m_sc[...] - m_new)
        p = jnp.exp(s - m_new)
        l_sc[...] = alpha * l_sc[...] + jnp.sum(p, axis=-1, keepdims=True)
        acc_sc[...] = alpha * acc_sc[...] + jnp.dot(
            p.astype(v.dtype), v, preferred_element_type=jnp.float32)
        m_sc[...] = m_new

    @pl.when(ki == pl.num_programs(2) - 1)
    def _():
        o_ref[0] = (acc_sc[...] *
                    pl.reciprocal(l_sc[...], approx=True)).astype(o_ref.dtype)


def flash_attention(q, k, v, *, scale):
    BH, T, hd = q.shape
    qt = _pick_tile(T, _ATTN_Q_CAP, 16)
    kt = _pick_tile(T, _ATTN_KV_CAP, 16)

    # Clamp k/v block indices for causally-dead tiles so the block index
    # repeats and Pallas elides the (wasted) DMA.
    def kv_map(b, qi, ki, qt=qt, kt=kt):
        return (b, jnp.minimum(ki, (qi * qt + qt - 1) // kt), 0)

    return pl.pallas_call(
        functools.partial(_flash_attn_kernel, scale, qt, kt),
        out_shape=jax.ShapeDtypeStruct((BH, T, hd), jnp.bfloat16),
        grid=(BH, T // qt, T // kt),
        in_specs=[pl.BlockSpec((1, qt, hd), lambda b, qi, ki: (b, qi, 0)),
                  pl.BlockSpec((1, kt, hd), kv_map),
                  pl.BlockSpec((1, kt, hd), kv_map)],
        out_specs=pl.BlockSpec((1, qt, hd), lambda b, qi, ki: (b, qi, 0)),
        scratch_shapes=[pltpu.VMEM((qt, 1), jnp.float32),
                        pltpu.VMEM((qt, 1), jnp.float32),
                        pltpu.VMEM((qt, hd), jnp.float32)],
        compiler_params=pltpu.CompilerParams(
            dimension_semantics=("parallel", "parallel", "arbitrary"),
            vmem_limit_bytes=_VMEM_LIMIT),
    )(q, k, v)


# ---------------------------------------------------------------------------
# Transformer block: LN1 -> QKV -> flash attn -> proj(+res) -> LN2 -> MLP(+res)
# ---------------------------------------------------------------------------
def transformer_block(x_flat, lp, B, T, n_head):
    M, C = x_flat.shape
    hd = C // n_head

    h1 = layernorm(x_flat, lp["g1"], lp["b1"])
    qkv = fused_matmul(h1, lp["wqkv"], lp["bqkv"], out_dtype=jnp.bfloat16)
    q, k, v = jnp.split(qkv, 3, axis=-1)

    def to_heads(t):
        return t.reshape(B, T, n_head, hd).transpose(0, 2, 1, 3).reshape(
            B * n_head, T, hd)

    attn = flash_attention(to_heads(q), to_heads(k), to_heads(v),
                           scale=1.0 / math.sqrt(hd))
    attn = attn.reshape(B, n_head, T, hd).transpose(0, 2, 1, 3).reshape(M, C)

    # single K=C output projection, residual fused; bf16 residual stream
    x_flat = fused_matmul(attn, lp["wo"], lp["bo"],
                          residual=x_flat, out_dtype=jnp.bfloat16)

    h2 = layernorm(x_flat, lp["g2"], lp["b2"])
    fc = fused_matmul(h2, lp["wfc"], lp["bfc"],
                      activation="gelu", out_dtype=jnp.bfloat16)
    x_flat = fused_matmul(fc, lp["wmp"], lp["bmp"],
                          residual=x_flat, out_dtype=jnp.bfloat16)
    return x_flat


# ---------------------------------------------------------------------------
# LM head fused with shifted cross-entropy (online LSE over vocab tiles)
# ---------------------------------------------------------------------------
def _lm_head_ce_kernel(vocab, v_tile, with_logits, *refs):
    if with_logits:
        (h_ref, w_ref, tgt_ref, wgt_ref,
         logits_ref, loss_ref, m_sc, l_sc, t_sc) = refs
    else:
        h_ref, w_ref, tgt_ref, wgt_ref, loss_ref, m_sc, l_sc, t_sc = refs
        logits_ref = None

    j = pl.program_id(1)

    @pl.when(j == 0)
    def _():
        m_sc[...] = jnp.full_like(m_sc, -jnp.inf)
        l_sc[...] = jnp.zeros_like(l_sc)
        t_sc[...] = jnp.zeros_like(t_sc)

    logits = jnp.dot(h_ref[...], w_ref[...],
                     preferred_element_type=jnp.float32)     # (rt, vt) f32
    if logits_ref is not None:
        logits_ref[...] = logits

    rt, vt = logits.shape
    col = j * v_tile + lax.broadcasted_iota(jnp.int32, (rt, vt), 1)
    masked = jnp.where(col < vocab, logits, -1e30)            # mask padded vocab
    m_new = jnp.maximum(m_sc[...], jnp.max(masked, axis=-1, keepdims=True))
    alpha = jnp.exp(m_sc[...] - m_new)
    l_sc[...] = alpha * l_sc[...] + jnp.sum(jnp.exp(masked - m_new),
                                            axis=-1, keepdims=True)
    m_sc[...] = m_new
    t_sc[...] += jnp.sum(jnp.where(col == tgt_ref[...], logits, 0.0),
                         axis=-1, keepdims=True)

    @pl.when(j == pl.num_programs(1) - 1)
    def _():
        lse = m_sc[...] + jnp.log(l_sc[...])
        loss_ref[...] = (lse - t_sc[...]) * wgt_ref[...]


def lm_head_with_loss(h, wte_t_pad, targets_shift, row_weight, vocab, n_valid,
                      *, with_logits=True):
    N, C = h.shape
    _, v_pad = wte_t_pad.shape
    rt = _pick_tile(N, _M_CAP, 8)          # larger row tile: weights streamed N/rt times
    vt = _pick_tile(v_pad, _N_CAP, 128)

    tgt = targets_shift.reshape(N, 1).astype(jnp.int32)
    wgt = row_weight.reshape(N, 1).astype(jnp.float32)

    in_specs = [pl.BlockSpec((rt, C), lambda i, j: (i, 0)),
                pl.BlockSpec((C, vt), lambda i, j: (0, j)),
                pl.BlockSpec((rt, 1), lambda i, j: (i, 0)),
                pl.BlockSpec((rt, 1), lambda i, j: (i, 0))]
    loss_spec = pl.BlockSpec((rt, 1), lambda i, j: (i, 0))
    loss_shape = jax.ShapeDtypeStruct((N, 1), jnp.float32)

    if with_logits:
        out_shape = (jax.ShapeDtypeStruct((N, v_pad), jnp.float32), loss_shape)
        out_specs = (pl.BlockSpec((rt, vt), lambda i, j: (i, j)), loss_spec)
    else:
        # loss-only mode: no multi-GB logits materialization (training path)
        out_shape = loss_shape
        out_specs = loss_spec

    outs = pl.pallas_call(
        functools.partial(_lm_head_ce_kernel, vocab, vt, with_logits),
        out_shape=out_shape,
        grid=(N // rt, v_pad // vt),
        in_specs=in_specs,
        out_specs=out_specs,
        scratch_shapes=[pltpu.VMEM((rt, 1), jnp.float32),
                        pltpu.VMEM((rt, 1), jnp.float32),
                        pltpu.VMEM((rt, 1), jnp.float32)],
        compiler_params=pltpu.CompilerParams(
            dimension_semantics=("parallel", "arbitrary"),
            vmem_limit_bytes=_VMEM_LIMIT),
    )(h.astype(jnp.bfloat16), wte_t_pad.astype(jnp.bfloat16), tgt, wgt)

    if with_logits:
        logits_pad, row_loss = outs
        loss = jnp.sum(row_loss) / float(n_valid)
        return logits_pad, loss
    row_loss = outs
    return jnp.sum(row_loss) / float(n_valid)


# ---------------------------------------------------------------------------
# Full model forward
# ---------------------------------------------------------------------------
def gpt_forward(params, idx, targets=None, return_logits=True):
    B, T = idx.shape
    C = params["wte"].shape[1]
    n_head = params["n_head"]
    vocab = params["vocab"]

    # glue: embedding gather + positional add (not a matmul hot path)
    x = params["wte"][idx] + params["wpe"][:T][None, :, :]
    x = x.astype(jnp.bfloat16).reshape(B * T, C)   # bf16 residual stream

    for lp in params["blocks"]:
        x = transformer_block(x, lp, B, T, n_head)

    # final LayerNorm hoisted out of the LM head (computed once per row)
    h = layernorm(x, params["gf"], params["bf"])

    if targets is None:
        logits_pad = fused_matmul(h, params["wte_t_pad"], None,
                                  out_dtype=jnp.float32)
        logits = logits_pad[:, :vocab].reshape(B, T, vocab)
        return logits, None

    # shifted targets / weights (loss over logits[:, :-1] vs targets[:, 1:])
    tgt_shift = jnp.concatenate(
        [targets[:, 1:], jnp.zeros((B, 1), targets.dtype)], axis=1).reshape(-1)
    wgt = jnp.concatenate(
        [jnp.ones((B, T - 1), jnp.float32),
         jnp.zeros((B, 1), jnp.float32)], axis=1).reshape(-1)

    if return_logits:
        logits_pad, loss = lm_head_with_loss(
            h, params["wte_t_pad"], tgt_shift, wgt, vocab, B * (T - 1),
            with_logits=True)
        logits = logits_pad[:, :vocab].reshape(B, T, vocab)
        return logits, loss

    loss = lm_head_with_loss(
        h, params["wte_t_pad"], tgt_shift, wgt, vocab, B * (T - 1),
        with_logits=False)
    return None, loss


# ---------------------------------------------------------------------------
# Deterministic parameter init (synthetic GPT-2-style weights)
# ---------------------------------------------------------------------------
def init_params(key, *, n_layer, n_head, n_embd, block_size, vocab,
                v_tile_cap=2048):
    C = n_embd
    keys = iter(jax.random.split(key, 2 + 4 * n_layer))

    def nrm(shape, std=W_STD):
        return (std * jax.random.normal(next(keys), shape)).astype(jnp.float32)

    wte = nrm((vocab, C))
    wpe = nrm((block_size, C), std=0.01)
    blocks = []
    for _ in range(n_layer):
        blocks.append(dict(
            g1=jnp.ones((1, C), jnp.float32), b1=jnp.zeros((1, C), jnp.float32),
            wqkv=nrm((C, 3 * C)).astype(jnp.bfloat16),
            bqkv=jnp.zeros((1, 3 * C), jnp.float32),
            wo=nrm((C, C), std=W_STD / math.sqrt(2 * n_layer)).astype(jnp.bfloat16),
            bo=jnp.zeros((1, C), jnp.float32),
            g2=jnp.ones((1, C), jnp.float32), b2=jnp.zeros((1, C), jnp.float32),
            wfc=nrm((C, 4 * C)).astype(jnp.bfloat16),
            bfc=jnp.zeros((1, 4 * C), jnp.float32),
            wmp=nrm((4 * C, C), std=W_STD / math.sqrt(2 * n_layer)).astype(jnp.bfloat16),
            bmp=jnp.zeros((1, C), jnp.float32),
        ))
    gf = jnp.ones((1, C), jnp.float32)
    bf = jnp.zeros((1, C), jnp.float32)

    # weight-tied LM head: wte^T, padded so the vocab axis tiles cleanly
    # (v_pad is a multiple of 2048, hence also of the 1024 v5e vocab tile)
    v_tile = min(v_tile_cap, ((vocab + 127) // 128) * 128)
    v_pad = ((vocab + v_tile - 1) // v_tile) * v_tile
    wte_t_pad = jnp.pad(wte, ((0, v_pad - vocab), (0, 0))).T.astype(jnp.bfloat16)

    return dict(wte=wte, wpe=wpe, blocks=blocks, gf=gf, bf=bf,
                wte_t_pad=wte_t_pad, n_head=n_head, vocab=vocab)


if __name__ == "__main__":
    # small config consistent with the module's forward
    n_layer, n_head, n_embd, block_size = 2, 2, 32, 8
    vocab = 50257
    B, T = 2, 8

    key = jax.random.PRNGKey(0)
    kp, ki, kt = jax.random.split(key, 3)
    params = init_params(kp, n_layer=n_layer, n_head=n_head, n_embd=n_embd,
                         block_size=block_size, vocab=vocab)
    idx = jax.random.randint(ki, (B, T), 0, vocab, dtype=jnp.int32)
    targets = jax.random.randint(kt, (B, T), 0, vocab, dtype=jnp.int32)

    # TODO(synk): dropout layers omitted (stochastic); this matches eval-mode forward.
    # Full path (module semantics: logits + loss)
    logits, loss = gpt_forward(params, idx, targets)
    # Fast training path (no logits materialization) — must give the same loss
    _, loss_fast = gpt_forward(params, idx, targets, return_logits=False)
    logits, loss, loss_fast = jax.block_until_ready((logits, loss, loss_fast))

    assert logits.shape == (B, T, vocab), logits.shape
    assert logits.dtype == jnp.float32
    assert bool(jnp.isfinite(loss)), loss
    assert abs(float(loss) - float(loss_fast)) <= 1e-3 * max(1.0, abs(float(loss)))
    print("KERNEL_OK")
</pallas_src>

<mosaic_0001>
module attributes {stable_mosaic.version = 11 : i64} {
  func.func @_ln_kernel(%arg0: i32, %arg1: memref<16x32xbf16, #tpu.memory_space<vmem>>, %arg2: memref<1x32xf32, #tpu.memory_space<vmem>>, %arg3: memref<1x32xf32, #tpu.memory_space<vmem>>, %arg4: memref<16x32xbf16, #tpu.memory_space<vmem>>) attributes {dimension_semantics = [#tpu.dimension_semantics<parallel>], iteration_bounds = array<i64: 1>, scalar_prefetch = 0 : i64, scratch_operands = 0 : i64, tpu.core_type = #tpu.core_type<tc>, window_params = [{transform_indices = @transform_0, window_bounds = array<i64: 16, 32>}, {pipeline_mode = #tpu.pipeline_mode<synchronous>, transform_indices = @transform_1, window_bounds = array<i64: 1, 32>}, {pipeline_mode = #tpu.pipeline_mode<synchronous>, transform_indices = @transform_2, window_bounds = array<i64: 1, 32>}, {transform_indices = @transform_3, window_bounds = array<i64: 16, 32>}]} {
    %c0 = arith.constant 0 : index
    %c0_0 = arith.constant 0 : index
    %0 = vector.load %arg1[%c0, %c0_0] : memref<16x32xbf16, #tpu.memory_space<vmem>>, vector<16x32xbf16>
    %1 = arith.extf %0 : vector<16x32xbf16> to vector<16x32xf32>
    %cst = arith.constant dense<0.000000e+00> : vector<16xf32>
    %2 = vector.multi_reduction <add>, %1, %cst [1] : vector<16x32xf32> to vector<16xf32>
    %3 = vector.shape_cast %2 : vector<16xf32> to vector<16x1xf32>
    %cst_1 = arith.constant 3.200000e+01 : f32
    %4 = vector.broadcast %cst_1 : f32 to vector<16x1xf32>
    %5 = arith.divf %3, %4 : vector<16x1xf32>
    %6 = vector.broadcast %5 : vector<16x1xf32> to vector<16x32xf32>
    %7 = arith.subf %1, %6 : vector<16x32xf32>
    %8 = arith.mulf %7, %7 : vector<16x32xf32>
    %cst_2 = arith.constant dense<0.000000e+00> : vector<16xf32>
    %9 = vector.multi_reduction <add>, %8, %cst_2 [1] : vector<16x32xf32> to vector<16xf32>
    %10 = vector.shape_cast %9 : vector<16xf32> to vector<16x1xf32>
    %cst_3 = arith.constant 3.200000e+01 : f32
    %11 = vector.broadcast %cst_3 : f32 to vector<16x1xf32>
    %12 = arith.divf %10, %11 : vector<16x1xf32>
    %13 = vector.broadcast %5 : vector<16x1xf32> to vector<16x32xf32>
    %14 = arith.subf %1, %13 : vector<16x32xf32>
    %cst_4 = arith.constant 9.99999974E-6 : f32
    %15 = vector.broadcast %cst_4 : f32 to vector<16x1xf32>
    %16 = arith.addf %12, %15 : vector<16x1xf32>
    %17 = math.rsqrt %16 : vector<16x1xf32>
    %18 = vector.broadcast %17 : vector<16x1xf32> to vector<16x32xf32>
    %19 = arith.mulf %14, %18 : vector<16x32xf32>
    %c0_5 = arith.constant 0 : index
    %c0_6 = arith.constant 0 : index
    %20 = vector.load %arg2[%c0_5, %c0_6] : memref<1x32xf32, #tpu.memory_space<vmem>>, vector<1x32xf32>
    %21 = vector.broadcast %20 : vector<1x32xf32> to vector<16x32xf32>
    %22 = arith.mulf %19, %21 : vector<16x32xf32>
    %c0_7 = arith.constant 0 : index
    %c0_8 = arith.constant 0 : index
    %23 = vector.load %arg3[%c0_7, %c0_8] : memref<1x32xf32, #tpu.memory_space<vmem>>, vector<1x32xf32>
    %24 = vector.broadcast %23 : vector<1x32xf32> to vector<16x32xf32>
    %25 = arith.addf %22, %24 : vector<16x32xf32>
    %26 = arith.truncf %25 : vector<16x32xf32> to vector<16x32xbf16>
    %c0_9 = arith.constant 0 : index
    %c0_10 = arith.constant 0 : index
    %27 = vector.load %arg4[%c0_9, %c0_10] : memref<16x32xbf16, #tpu.memory_space<vmem>>, vector<16x32xbf16>
    tpu.vector_store %arg4[%c0_9, %c0_10], %26 {strides = array<i32>} : memref<16x32xbf16, #tpu.memory_space<vmem>>, vector<16x32xbf16>,
    return
  }
  func.func @transform_0(%arg0: i32) -> (i32, i32) {
    %c0_i32 = arith.constant 0 : i32
    %c0_i32_0 = arith.constant 0 : i32
    return %arg0, %c0_i32 : i32, i32
  }
  func.func @transform_1(%arg0: i32) -> (i32, i32) {
    %c0_i32 = arith.constant 0 : i32
    %c0_i32_0 = arith.constant 0 : i32
    %c0_i32_1 = arith.constant 0 : i32
    return %c0_i32, %c0_i32_0 : i32, i32
  }
  func.func @transform_2(%arg0: i32) -> (i32, i32) {
    %c0_i32 = arith.constant 0 : i32
    %c0_i32_0 = arith.constant 0 : i32
    %c0_i32_1 = arith.constant 0 : i32
    return %c0_i32, %c0_i32_0 : i32, i32
  }
  func.func @transform_3(%arg0: i32) -> (i32, i32) {
    %c0_i32 = arith.constant 0 : i32
    %c0_i32_0 = arith.constant 0 : i32
    return %arg0, %c0_i32 : i32, i32
  }
}

</mosaic_0001>

<llo_original>
// kernel: tpu_custom_call.1
$region0: #{tpu_custom_call.1}
  #allocation0 [shape = 'u32[]', space=smem, size = 0x4, offset = 0x4, fixed_abs, tag = 'smem constant byte address 0x4 - core index']
  #allocation1 [shape = 'u32[144,128]{1,0:T(1,128)}', space=vmem, size = 0x12000, scoped, tag = 'internal scratch']
  %s0 = inlined_call_operand.hbm [shape: bf16[16,32], index: 0, kind: input, shape index: {}]
  %s1 = inlined_call_operand.hbm [shape: f32[1,32], index: 1, kind: input, shape index: {}]
  %s2 = inlined_call_operand.hbm [shape: f32[1,32], index: 2, kind: input, shape index: {}]
  %s3 = inlined_call_operand.hbm [shape: bf16[16,32], index: 3, kind: output, shape index: {}]
  %s4 = sld [smem:[#allocation0]]
  $region34: #{tpu_custom_call.1} parent=0
    _
  %s6 = ssub.s32 1, %s4
  %s7 = scalar_select 0, %s6, %s4
  $region1: #{tpu_custom_call.1} parent=0
    #allocation2 [shape = 'u8[4096]{0}', space=vmem, size = 0x1000, scoped, tag = 'input window, operand 0, single buffered']
    #allocation3 [shape = 's32[1]{0}', space=sflag, size = 0x4, scoped, tag = 'scoped memory for tpu_custom_call.1']
    #allocation4 [shape = 's32[1]{0}', space=sflag, size = 0x4, scoped, tag = 'scoped memory for tpu_custom_call.1']
    #allocation5 [shape = 'u8[512]{0}', space=vmem, size = 0x400, scoped, tag = 'input window, operand 1, single buffered']
    #allocation6 [shape = 's32[1]{0}', space=sflag, size = 0x4, scoped, tag = 'scoped memory for tpu_custom_call.1']
    #allocation7 [shape = 'u8[512]{0}', space=vmem, size = 0x400, scoped, tag = 'input window, operand 2, single buffered']
    #allocation8 [shape = 'u8[4096]{0}', space=vmem, size = 0x1000, scoped, tag = 'output window, operand 0, single buffered']
    %8 = vsyncpa [#allocation3], 0
    %9 = vsyncpa [#allocation6], 0
    %10 = vsyncpa [#allocation4], 0
    // Predicated region
    $region2: #{tpu_custom_call.1} parent=1 // pred_check
      _
    $region3: #{tpu_custom_call.1} parent=1 // pred_check_branch
      %12 = sbr.rel (0) target = $region5
    $region4: #{tpu_custom_call.1} parent=1 // pred_region
      %s14 = ssub.s32 128, 128
      %15 = vsyncadd [#allocation3], %s14
      %s16 = sshll.u32 [#allocation2], 4
      %s17 = int_to_ptr.vmem [resolvable:$true] %s16
      %22 = dma.hbm_to_vmem [thread:$0]  %s0, 128, %s17, [#allocation3], 64, 64, 4
    $region5: #{tpu_custom_call.1} parent=1 // pred_fallthru
      _
    // Predicated region
    $region6: #{tpu_custom_call.1} parent=1 // pred_check
      _
    $region7: #{tpu_custom_call.1} parent=1 // pred_check_branch
      %24 = sbr.rel (0) target = $region9
    $region8: #{tpu_custom_call.1} parent=1 // pred_region
      %s26 = ssub.s32 16, 16
      %27 = vsyncadd [#allocation6], %s26
      %s29 = sshll.u32 [#allocation5], 4
      %s30 = int_to_ptr.vmem [resolvable:$true] %s29
      %32 = dma.hbm_to_vmem [thread:$0]  %s1, 16, %s30, [#allocation6]
    $region9: #{tpu_custom_call.1} parent=1 // pred_fallthru
      _
    // Predicated region
    $region10: #{tpu_custom_call.1} parent=1 // pred_check
      _
    $region11: #{tpu_custom_call.1} parent=1 // pred_check_branch
      %34 = sbr.rel (0) target = $region13
    $region12: #{tpu_custom_call.1} parent=1 // pred_region
      %s36 = ssub.s32 16, 16
      %37 = vsyncadd [#allocation6], %s36
      %s39 = sshll.u32 [#allocation7], 4
      %s40 = int_to_ptr.vmem [resolvable:$true] %s39
      %42 = dma.hbm_to_vmem [thread:$0]  %s2, 16, %s40, [#allocation6]
    $region13: #{tpu_custom_call.1} parent=1 // pred_fallthru
      _
    // Predicated region
    $region14: #{tpu_custom_call.1} parent=1 // pred_check
      _
    $region15: #{tpu_custom_call.1} parent=1 // pred_check_branch
      %44 = sbr.rel (0) target = $region17
    $region16: #{tpu_custom_call.1} parent=1 // pred_region
      %45 = dma.done [#allocation3], 128
    $region17: #{tpu_custom_call.1} parent=1 // pred_fallthru
      _
    // Predicated region
    $region18: #{tpu_custom_call.1} parent=1 // pred_check
      _
    $region19: #{tpu_custom_call.1} parent=1 // pred_check_branch
      %47 = sbr.rel (0) target = $region21
    $region20: #{tpu_custom_call.1} parent=1 // pred_region
      %48 = dma.done [#allocation6], 16
    $region21: #{tpu_custom_call.1} parent=1 // pred_fallthru
      _
    // Predicated region
    $region22: #{tpu_custom_call.1} parent=1 // pred_check
      _
    $region23: #{tpu_custom_call.1} parent=1 // pred_check_branch
      %50 = sbr.rel (0) target = $region25
    $region24: #{tpu_custom_call.1} parent=1 // pred_region
      %51 = dma.done [#allocation6], 16
    $region25: #{tpu_custom_call.1} parent=1 // pred_fallthru
      _
    %v52 = vld [vmem:[#allocation2] sm:$0xf]
    %v53 = vld [vmem:[#allocation2 + $0x4] sm:$0xf]
    %v54 = vunpack.c.l.bf16 %v52
    %v55 = vunpack.c.l.bf16 %v53
    %vm56 = vcmask 261120
    %v57 = vsel %vm56, %v54, 0.0
    %58 = vadd.xlane.f32.xlu0 %v57
    %v59 = vpop.xlane.xlu0 %58
    %v60 = vsel %vm56, %v55, 0.0
    %61 = vadd.xlane.f32.xlu0 %v60
    %v62 = vpop.xlane.xlu0 %61
    %v63 = vrcp.pop 32.0
    %v64 = vmul.f32 %v59, %v63
    %v65 = vmul.f32 %v62, %v63
    %v66 = vsub.f32 %v54, %v64
    %v67 = vsub.f32 %v55, %v65
    %v68 = vmul.f32 %v66, %v66
    %v69 = vmul.f32 %v67, %v67
    %v70 = vsel %vm56, %v68, 0.0
    %71 = vadd.xlane.f32.xlu0 %v70
    %v72 = vpop.xlane.xlu0 %71
    %v73 = vsel %vm56, %v69, 0.0
    %74 = vadd.xlane.f32.xlu0 %v73
    %v75 = vpop.xlane.xlu0 %74
    %v76 = vmul.f32 %v72, %v63
    %v77 = vmul.f32 %v75, %v63
    %v78 = vadd.f32 %v76, 1e-05
    %v79 = vadd.f32 %v77, 1e-05
    %v80 = vrsqrt.pop %v78
    %v81 = vrsqrt.pop %v79
    %v82 = vmul.f32 %v66, %v80
    %v83 = vmul.f32 %v67, %v81
    %v84 = vld [vmem:[#allocation5] sm:$0x1]
    %v86 = vlaneseq
    %v87 = vshrl.u32 %v86, 7
    %v88 = vsub.s32 0, %v87
    %v89 = vrot.slane %v84, %v88
    %v91 = vmul.f32 %v82, %v89
    %v92 = vmul.f32 %v83, %v89
    %v93 = vld [vmem:[#allocation7] sm:$0x1]
    %v95 = vlaneseq
    %v96 = vshrl.u32 %v95, 7
    %v97 = vsub.s32 0, %v96
    %v98 = vrot.slane %v93, %v97
    %v100 = vadd.f32 %v91, %v98
    %v101 = vadd.f32 %v92, %v98
    %v102 = vpack.c.bf16 %v101, %v100
    %v104 = vunpack.c.l.b16 %v102
    %v105 = vunpack.c.h.b16 %v102
    %v106 = vpack.c.b16 %v104, %v104
    %v107 = vpack.c.b16 %v105, %v105
    %vm110 = vcmask 257024
    %111 = vst.msk [vmem:[#allocation8] sm:$0xf] %vm110, %v106
    %112 = vst.msk [vmem:[#allocation8 + $0x4] sm:$0xf] %vm110, %v107
    // Predicated region
    $region26: #{tpu_custom_call.1} parent=1 // pred_check
      _
    $region27: #{tpu_custom_call.1} parent=1 // pred_check_branch
      %114 = sbr.rel (0) target = $region29
    $region28: #{tpu_custom_call.1} parent=1 // pred_region
      %s116 = ssub.s32 128, 128
      %117 = vsyncadd [#allocation4], %s116
      %s118 = sshll.u32 [#allocation8], 4
      %s119 = int_to_ptr.vmem [resolvable:$true] %s118
      %124 = dma.vmem_to_hbm [thread:$0]  %s119, 128, %s3, [#allocation4], 64, 64, 4
    $region29: #{tpu_custom_call.1} parent=1 // pred_fallthru
      _
    // Predicated region
    $region30: #{tpu_custom_call.1} parent=1 // pred_check
      _
    $region31: #{tpu_custom_call.1} parent=1 // pred_check_branch
      %126 = sbr.rel (0) target = $region33
    $region32: #{tpu_custom_call.1} parent=1 // pred_region
      %127 = dma.done [#allocation4], 128
    $region33: #{tpu_custom_call.1} parent=1 // pred_fallthru
      _
    %128 = vsyncpa [#allocation3], 1
    %129 = vsyncpa [#allocation6], 1
    %130 = vsyncpa [#allocation4], 1

</llo_original>
